<compile_context>
chip_gen: v7x
topology: tpu7x:2x2x1
jax: 0.10.0
libtpu: 0.0.40
codegen_flags: <defaults>
</compile_context>

<pallas_src>
import jax
import jax.numpy as jnp
from jax.experimental import pallas as pl
from jax.experimental.pallas import tpu as pltpu


# --------------------------------------------------------------------------
# Pass A: input projection  gates_x[t*Bp+b, :] = x_t @ W_ih^T + (b_ih + b_hh)
# --------------------------------------------------------------------------
def input_proj_kernel(x_ref, wih_ref, b_ref, gx_ref):
    x_bf = x_ref[...].astype(jnp.bfloat16)
    gx_ref[...] = (
        jnp.dot(x_bf, wih_ref[...], preferred_element_type=jnp.float32)
        + b_ref[...]
    )


# --------------------------------------------------------------------------
# Pass B: recurrence.  Per timestep only h @ W_hh^T + elementwise cell update.
# h/c are carried in VMEM scratch across the sequential ("arbitrary") grid.
# --------------------------------------------------------------------------
def recurrent_kernel(gx_ref, whh_ref, hall_ref, h_sc, c_sc):
    Bp, Hp = h_sc.shape
    Tb = hall_ref.shape[0] // Bp

    @pl.when(pl.program_id(0) == 0)
    def _():
        h_sc[...] = jnp.zeros_like(h_sc)
        c_sc[...] = jnp.zeros_like(c_sc)

    # Static, fully-unrolled inner loop over the timesteps of this block.
    for tt in range(Tb):
        r0 = tt * Bp
        h = h_sc[...]
        c = c_sc[...]
        gates = gx_ref[pl.ds(r0, Bp), :] + jnp.dot(
            h.astype(jnp.bfloat16), whh_ref[...],
            preferred_element_type=jnp.float32)          # (Bp, 4*Hp)

        # PyTorch gate order i, f, g, o; slices are 128-lane aligned (Hp=128k).
        i_g = jax.nn.sigmoid(gates[:, 0:Hp])
        f_g = jax.nn.sigmoid(gates[:, Hp:2 * Hp])
        g_g = jnp.tanh(gates[:, 2 * Hp:3 * Hp])
        o_g = jax.nn.sigmoid(gates[:, 3 * Hp:4 * Hp])

        c_new = f_g * c + i_g * g_g
        h_new = o_g * jnp.tanh(c_new)
        c_sc[...] = c_new
        h_sc[...] = h_new
        # bf16 store: next pass re-casts to bf16 anyway; halves HBM traffic.
        hall_ref[pl.ds(r0, Bp), :] = h_new.astype(hall_ref.dtype)


# --------------------------------------------------------------------------
# Pass C: output projection + log_softmax, batched over all (T*Bp) rows.
# --------------------------------------------------------------------------
def output_proj_kernel(h_ref, wout_ref, bout_ref, out_ref):
    logits = (
        jnp.dot(h_ref[...], wout_ref[...], preferred_element_type=jnp.float32)
        + bout_ref[...]
    )
    m = jnp.max(logits, axis=-1, keepdims=True)
    lse = jnp.log(jnp.sum(jnp.exp(logits - m), axis=-1, keepdims=True)) + m
    out_ref[...] = (logits - lse).astype(out_ref.dtype)


# --------------------------------------------------------------------------
# Wrapper
# --------------------------------------------------------------------------
def _round_up(x, m):
    return (x + m - 1) // m * m


def _pick_t_block(T, target):
    for tb in range(min(T, target), 0, -1):
        if T % tb == 0:
            return tb
    return 1


def lstm_forward(x, params, t_block=4):
    """x: (B, T, V) float32 -> log-probs (B, T, V) float32."""
    B, T, V = x.shape
    H = params["w_hh_t"].shape[0]

    Bp = _round_up(B, 8)       # f32 sublane alignment
    Hp = _round_up(H, 128)     # gate slices land on 128-lane boundaries
    Vp = _round_up(V, 128)     # lane-dense output stores
    G = 4 * Hp
    Tb = _pick_t_block(T, t_block)   # timesteps per sequential grid step
    RT = Tb * Bp                     # rows per grid step in the 2-D passes
    N = T * Bp

    # ---- pad parameters (per-gate aware along the 4H axis) -----------------
    def pad_gate_mat(w_t, rows, rows_p):
        # w_t: (rows, 4*H) with gate-major columns -> (rows_p, 4*Hp)
        w4 = w_t.reshape(rows, 4, H)
        out = jnp.zeros((rows_p, 4, Hp), w_t.dtype).at[:rows, :, :H].set(w4)
        return out.reshape(rows_p, G)

    wih = pad_gate_mat(params["w_ih_t"], V, Vp)                       # bf16 (Vp, 4Hp)
    whh = pad_gate_mat(params["w_hh_t"], H, Hp)                       # bf16 (Hp, 4Hp)
    b = (jnp.zeros((4, Hp), jnp.float32)
         .at[:, :H].set(params["b"].reshape(4, H)).reshape(1, G))     # f32  (1, 4Hp)
    wout = (jnp.zeros((Hp, Vp), params["w_out_t"].dtype)
            .at[:H, :V].set(params["w_out_t"]))                       # bf16 (Hp, Vp)
    bout = (jnp.full((1, Vp), -1e30, jnp.float32)
            .at[0, :V].set(params["b_out"]))                          # f32  (1, Vp)

    # ---- pad + time-major flatten x: (B,T,V) -> (T*Bp, Vp) -----------------
    xp = jnp.zeros((Bp, T, Vp), jnp.float32).at[:B, :, :V].set(x)
    x2d = jnp.transpose(xp, (1, 0, 2)).reshape(N, Vp)

    # ---- Pass A: input projection (parallel) --------------------------------
    gates_x = pl.pallas_call(
        input_proj_kernel,
        out_shape=jax.ShapeDtypeStruct((N, G), jnp.float32),
        grid_spec=pltpu.PrefetchScalarGridSpec(
            num_scalar_prefetch=0,
            grid=(N // RT,),
            in_specs=[
                pl.BlockSpec((RT, Vp), lambda i: (i, 0)),   # x rows
                pl.BlockSpec((Vp, G), lambda i: (0, 0)),    # W_ih^T
                pl.BlockSpec((1, G), lambda i: (0, 0)),     # b_ih + b_hh
            ],
            out_specs=pl.BlockSpec((RT, G), lambda i: (i, 0)),
        ),
        compiler_params=pltpu.CompilerParams(
            dimension_semantics=("parallel",)),
    )(x2d, wih, b)

    # ---- Pass B: recurrence (strictly sequential over time blocks) ---------
    h_all = pl.pallas_call(
        recurrent_kernel,
        out_shape=jax.ShapeDtypeStruct((N, Hp), jnp.bfloat16),
        grid_spec=pltpu.PrefetchScalarGridSpec(
            num_scalar_prefetch=0,
            grid=(T // Tb,),
            in_specs=[
                pl.BlockSpec((RT, G), lambda t: (t, 0)),    # gates_x block
                pl.BlockSpec((Hp, G), lambda t: (0, 0)),    # W_hh^T
            ],
            out_specs=pl.BlockSpec((RT, Hp), lambda t: (t, 0)),
            scratch_shapes=[pltpu.VMEM((Bp, Hp), jnp.float32),   # h carry
                            pltpu.VMEM((Bp, Hp), jnp.float32)],  # c carry
        ),
        compiler_params=pltpu.CompilerParams(
            dimension_semantics=("arbitrary",)),   # time must stay sequential
    )(gates_x, whh)

    # ---- Pass C: output projection + log_softmax (parallel) ----------------
    out2d = pl.pallas_call(
        output_proj_kernel,
        out_shape=jax.ShapeDtypeStruct((N, Vp), jnp.float32),
        grid_spec=pltpu.PrefetchScalarGridSpec(
            num_scalar_prefetch=0,
            grid=(N // RT,),
            in_specs=[
                pl.BlockSpec((RT, Hp), lambda i: (i, 0)),   # h rows (bf16)
                pl.BlockSpec((Hp, Vp), lambda i: (0, 0)),   # W_out^T
                pl.BlockSpec((1, Vp), lambda i: (0, 0)),    # b_out (-1e30 pad)
            ],
            out_specs=pl.BlockSpec((RT, Vp), lambda i: (i, 0)),
        ),
        compiler_params=pltpu.CompilerParams(
            dimension_semantics=("parallel",)),
    )(h_all, wout, bout)

    # ---- un-pad back to (B, T, V) -------------------------------------------
    out = out2d.reshape(T, Bp, Vp)[:, :B, :V]
    return jnp.transpose(out, (1, 0, 2))


def init_params(key, vocab_size, hidden_size):
    """PyTorch-style init (uniform +-1/sqrt(H)); weights stored bf16 for MXU."""
    k = jax.random.split(key, 6)
    s = 1.0 / jnp.sqrt(hidden_size)
    w_ih = jax.random.uniform(k[0], (4 * hidden_size, vocab_size), jnp.float32, -s, s)
    w_hh = jax.random.uniform(k[1], (4 * hidden_size, hidden_size), jnp.float32, -s, s)
    b_ih = jax.random.uniform(k[2], (4 * hidden_size,), jnp.float32, -s, s)
    b_hh = jax.random.uniform(k[3], (4 * hidden_size,), jnp.float32, -s, s)
    w_out = jax.random.uniform(k[4], (vocab_size, hidden_size), jnp.float32, -s, s)
    b_out = jax.random.uniform(k[5], (vocab_size,), jnp.float32, -s, s)
    return {
        "w_ih_t": w_ih.T.astype(jnp.bfloat16),    # (V, 4H)
        "w_hh_t": w_hh.T.astype(jnp.bfloat16),    # (H, 4H)
        "b": (b_ih + b_hh).astype(jnp.float32),   # (4H,)
        "w_out_t": w_out.T.astype(jnp.bfloat16),  # (H, V)
        "b_out": b_out.astype(jnp.float32),       # (V,)
    }


def lstm_reference(x, params):
    """Pure-JAX reference (lax.scan) mirroring the kernel's bf16 matmul inputs
    with f32 accumulation and f32 elementwise math."""
    B, T, V = x.shape
    H = params["w_hh_t"].shape[0]
    wih = params["w_ih_t"].astype(jnp.float32)
    whh = params["w_hh_t"].astype(jnp.float32)
    wout = params["w_out_t"].astype(jnp.float32)
    b = params["b"][None, :]
    bout = params["b_out"][None, :]
    bf = lambda a: a.astype(jnp.bfloat16).astype(jnp.float32)

    def step(carry, x_t):
        h, c = carry
        gates = bf(x_t) @ wih + bf(h) @ whh + b
        i_g = jax.nn.sigmoid(gates[:, 0:H])
        f_g = jax.nn.sigmoid(gates[:, H:2 * H])
        g_g = jnp.tanh(gates[:, 2 * H:3 * H])
        o_g = jax.nn.sigmoid(gates[:, 3 * H:4 * H])
        c_new = f_g * c + i_g * g_g
        h_new = o_g * jnp.tanh(c_new)
        logits = bf(h_new) @ wout + bout
        return (h_new, c_new), jax.nn.log_softmax(logits, axis=-1)

    init = (jnp.zeros((B, H), jnp.float32), jnp.zeros((B, H), jnp.float32))
    _, out_tbv = jax.lax.scan(step, init, jnp.transpose(x, (1, 0, 2)))
    return jnp.transpose(out_tbv, (1, 0, 2))


if __name__ == "__main__":
    B, T, V, H = 2, 8, 16, 32   # batch, seq, vocab_size, hidden_size
    key = jax.random.PRNGKey(0)
    kx, kp = jax.random.split(key)
    x = jax.random.normal(kx, (B, T, V), jnp.float32)
    params = init_params(kp, V, H)

    out = jax.block_until_ready(lstm_forward(x, params))
    ref = jax.block_until_ready(lstm_reference(x, params))

    assert out.shape == (B, T, V)
    assert bool(jnp.allclose(out, ref, atol=1e-3, rtol=1e-3)), "mismatch vs reference"

    print("KERNEL_OK")
</pallas_src>

<mosaic_0001>
module attributes {stable_mosaic.version = 11 : i64} {
  func.func @input_proj_kernel(%arg0: i32, %arg1: memref<32x128xf32, #tpu.memory_space<vmem>>, %arg2: memref<128x512xbf16, #tpu.memory_space<vmem>>, %arg3: memref<1x512xf32, #tpu.memory_space<vmem>>, %arg4: memref<32x512xf32, #tpu.memory_space<vmem>>) attributes {dimension_semantics = [#tpu.dimension_semantics<parallel>], iteration_bounds = array<i64: 2>, scalar_prefetch = 0 : i64, scratch_operands = 0 : i64, tpu.core_type = #tpu.core_type<tc>, window_params = [{transform_indices = @transform_0, window_bounds = array<i64: 32, 128>}, {pipeline_mode = #tpu.pipeline_mode<synchronous>, transform_indices = @transform_1, window_bounds = array<i64: 128, 512>}, {pipeline_mode = #tpu.pipeline_mode<synchronous>, transform_indices = @transform_2, window_bounds = array<i64: 1, 512>}, {transform_indices = @transform_3, window_bounds = array<i64: 32, 512>}]} {
    %c0 = arith.constant 0 : index
    %c0_0 = arith.constant 0 : index
    %0 = vector.load %arg1[%c0, %c0_0] : memref<32x128xf32, #tpu.memory_space<vmem>>, vector<32x128xf32>
    %1 = arith.truncf %0 : vector<32x128xf32> to vector<32x128xbf16>
    %c0_1 = arith.constant 0 : index
    %c0_2 = arith.constant 0 : index
    %2 = vector.load %arg2[%c0_1, %c0_2] : memref<128x512xbf16, #tpu.memory_space<vmem>>, vector<128x512xbf16>
    %cst = arith.constant dense<0.000000e+00> : vector<32x512xf32>
    %3 = tpu.matmul %1, %2, %cst {dimension_numbers = #tpu.dot_dimension_numbers<[1], [0], [0], [1], [0, 0, 1, 1], [], []>} : vector<32x128xbf16>, vector<128x512xbf16>, vector<32x512xf32> -> vector<32x512xf32>
    %c0_3 = arith.constant 0 : index
    %c0_4 = arith.constant 0 : index
    %4 = vector.load %arg3[%c0_3, %c0_4] : memref<1x512xf32, #tpu.memory_space<vmem>>, vector<1x512xf32>
    %5 = vector.broadcast %4 : vector<1x512xf32> to vector<32x512xf32>
    %6 = arith.addf %3, %5 : vector<32x512xf32>
    %c0_5 = arith.constant 0 : index
    %c0_6 = arith.constant 0 : index
    %7 = vector.load %arg4[%c0_5, %c0_6] : memref<32x512xf32, #tpu.memory_space<vmem>>, vector<32x512xf32>
    tpu.vector_store %arg4[%c0_5, %c0_6], %6 {strides = array<i32>} : memref<32x512xf32, #tpu.memory_space<vmem>>, vector<32x512xf32>,
    return
  }
  func.func @transform_0(%arg0: i32) -> (i32, i32) {
    %c0_i32 = arith.constant 0 : i32
    %c0_i32_0 = arith.constant 0 : i32
    return %arg0, %c0_i32 : i32, i32
  }
  func.func @transform_1(%arg0: i32) -> (i32, i32) {
    %c0_i32 = arith.constant 0 : i32
    %c0_i32_0 = arith.constant 0 : i32
    %c0_i32_1 = arith.constant 0 : i32
    return %c0_i32, %c0_i32_0 : i32, i32
  }
  func.func @transform_2(%arg0: i32) -> (i32, i32) {
    %c0_i32 = arith.constant 0 : i32
    %c0_i32_0 = arith.constant 0 : i32
    %c0_i32_1 = arith.constant 0 : i32
    return %c0_i32, %c0_i32_0 : i32, i32
  }
  func.func @transform_3(%arg0: i32) -> (i32, i32) {
    %c0_i32 = arith.constant 0 : i32
    %c0_i32_0 = arith.constant 0 : i32
    return %arg0, %c0_i32 : i32, i32
  }
}

</mosaic_0001>

<llo_original>
// kernel: tpu_custom_call.1
$region0: #{tpu_custom_call.1}
  #allocation0 [shape = 'u32[]', space=smem, size = 0x4, offset = 0x4, fixed_abs, tag = 'smem constant byte address 0x4 - core index']
  #allocation1 [shape = 'u32[144,128]{1,0:T(1,128)}', space=vmem, size = 0x12000, scoped, tag = 'internal scratch']
  %s0 = inlined_call_operand.hbm [shape: f32[64,128], index: 0, kind: input, shape index: {}]
  %s1 = inlined_call_operand.hbm [shape: bf16[128,512], index: 1, kind: input, shape index: {}]
  %s2 = inlined_call_operand.vmem [shape: f32[1,512], index: 2, kind: input, shape index: {}]
  %s3 = inlined_call_operand.hbm [shape: f32[64,512], index: 3, kind: output, shape index: {}]
  %s4 = sld [smem:[#allocation0]]
  $region53: #{tpu_custom_call.1} parent=0
    _
  %s6 = ssub.s32 1, %s4
  %s7 = scalar_select 0, %s6, %s4
  $region1: #{tpu_custom_call.1} parent=0
    #allocation2 [shape = 'u8[32768]{0}', space=vmem, size = 0x8000, scoped, tag = 'input window, operand 0']
    #allocation3 [shape = 's32[2]{0}', space=sflag, size = 0x8, scoped, tag = 'scoped memory for tpu_custom_call.1']
    #allocation4 [shape = 's32[2]{0}', space=sflag, size = 0x8, scoped, tag = 'scoped memory for tpu_custom_call.1']
    #allocation5 [shape = 'u8[131072]{0}', space=vmem, size = 0x20000, scoped, tag = 'input window, operand 1, single buffered']
    #allocation6 [shape = 's32[1]{0}', space=sflag, size = 0x4, scoped, tag = 'scoped memory for tpu_custom_call.1']
    #allocation7 [shape = 'u8[131072]{0}', space=vmem, size = 0x20000, scoped, tag = 'output window, operand 0']
    %8 = vsyncpa [#allocation3], 0
    %s9 = scalar_lea.sflag [#allocation3], 1
    %10 = vsyncpa %s9, 0
    %11 = vsyncpa [#allocation6], 0
    %12 = vsyncpa [#allocation4], 0
    %s13 = scalar_lea.sflag [#allocation4], 1
    %14 = vsyncpa %s13, 0
    loop: start=0, step=1, limit=4
    $region2: #{tpu_custom_call.1} parent=1 // loop_pre_header
      _
    $region3: #{tpu_custom_call.1} parent=1 // loop_header
      %s16 = sphi 0, %s20
      %p17 = scmp.ge.s32.totalorder %s16, 4
      %s26 = sphi 0, %s28
      %s29 = sphi 0, %s26
      %s30 = sphi 0, %s29
      %s46 = sphi 0, %s30
      %s50 = sphi 0, %s50
      %s52 = sphi 0, %s50
      %s53 = sphi 0, %s52
      %s67 = sphi 0, %s53
      %s71 = sphi 0, %s71
      %s73 = sphi 0, %s71
      %s74 = sphi 0, %s73
      %s88 = sphi 0, %s74
      %s94 = sphi 0, %s96
      %s97 = sphi 0, %s94
      %s98 = sphi 0, %s97
      %s114 = sphi 0, %s98
    $region4: #{tpu_custom_call.1} parent=1 // loop_header_branch
      %19 = sbr.rel (%p17) target = $region8
    $region5: #{tpu_custom_call.1} parent=1 // loop_body
      %s21 = ssub.s32 %s16, 1
      %s22 = ssub.s32 %s16, 2
      %s23 = sadd.s32 %s16, 1
      %s24 = ssub.s32 %s16, %s23
      %p25 = scmp.eq.s32.totalorder %s24, 0
      %s27 = sadd.s32 %s26, 1
      %s28 = scalar_select %p25, %s26, %s27
      %p31 = pneg %p25
      %p32 = scmp.eq.s32.totalorder %s16, 1
      %p33 = por %p31, %p32
      %p34 = scmp.ne.s32.totalorder %s26, %s29
      %p35 = scmp.eq.s32.totalorder %s16, 0
      %p36 = por %p34, %p35
      %p37 = scmp.ne.s32.totalorder %s26, %s29
      %p38 = scmp.eq.s32.totalorder %s21, 1
      %p39 = por %p37, %p38
      %p40 = scmp.ne.s32.totalorder %s29, %s30
      %p41 = scmp.eq.s32.totalorder %s21, 0
      %p42 = por %p40, %p41
      %p43 = scmp.ne.s32.totalorder %s29, %s30
      %p44 = scmp.eq.s32.totalorder %s22, 1
      %p45 = por %p43, %p44
      %p47 = scmp.ne.s32.totalorder %s30, %s46
      %p48 = scmp.eq.s32.totalorder %s22, 0
      %p49 = por %p47, %p48
      %s51 = sadd.s32 %s50, 1
      %p54 = scmp.eq.s32.totalorder %s16, 1
      %p55 = scmp.ne.s32.totalorder %s50, %s52
      %p56 = scmp.eq.s32.totalorder %s16, 0
      %p57 = por %p55, %p56
      %p58 = scmp.ne.s32.totalorder %s50, %s52
      %p59 = scmp.eq.s32.totalorder %s21, 1
      %p60 = por %p58, %p59
      %p61 = scmp.ne.s32.totalorder %s52, %s53
      %p62 = scmp.eq.s32.totalorder %s21, 0
      %p63 = por %p61, %p62
      %p64 = scmp.ne.s32.totalorder %s52, %s53
      %p65 = scmp.eq.s32.totalorder %s22, 1
      %p66 = por %p64, %p65
      %p68 = scmp.ne.s32.totalorder %s53, %s67
      %p69 = scmp.eq.s32.totalorder %s22, 0
      %p70 = por %p68, %p69
      %s72 = sadd.s32 %s71, 1
      %p75 = scmp.eq.s32.totalorder %s16, 1
      %p76 = scmp.ne.s32.totalorder %s71, %s73
      %p77 = scmp.eq.s32.totalorder %s16, 0
      %p78 = por %p76, %p77
      %p79 = scmp.ne.s32.totalorder %s71, %s73
      %p80 = scmp.eq.s32.totalorder %s21, 1
      %p81 = por %p79, %p80
      %p82 = scmp.ne.s32.totalorder %s73, %s74
      %p83 = scmp.eq.s32.totalorder %s21, 0
      %p84 = por %p82, %p83
      %p85 = scmp.ne.s32.totalorder %s73, %s74
      %p86 = scmp.eq.s32.totalorder %s22, 1
      %p87 = por %p85, %p86
      %p89 = scmp.ne.s32.totalorder %s74, %s88
      %p90 = scmp.eq.s32.totalorder %s22, 0
      %p91 = por %p89, %p90
      %s92 = ssub.s32 %s16, %s23
      %p93 = scmp.eq.s32.totalorder %s92, 0
      %s95 = sadd.s32 %s94, 1
      %s96 = scalar_select %p93, %s94, %s95
      %p99 = pneg %p93
      %p100 = scmp.eq.s32.totalorder %s16, 1
      %p101 = por %p99, %p100
      %p102 = scmp.ne.s32.totalorder %s94, %s97
      %p103 = scmp.eq.s32.totalorder %s16, 0
      %p104 = por %p102, %p103
      %p105 = scmp.ne.s32.totalorder %s94, %s97
      %p106 = scmp.eq.s32.totalorder %s21, 1
      %p107 = por %p105, %p106
      %p108 = scmp.ne.s32.totalorder %s97, %s98
      %p109 = scmp.eq.s32.totalorder %s21, 0
      %p110 = por %p108, %p109
      %p111 = scmp.ne.s32.totalorder %s97, %s98
      %p112 = scmp.eq.s32.totalorder %s22, 1
      %p113 = por %p111, %p112
      %p115 = scmp.ne.s32.totalorder %s98, %s114
      %p116 = scmp.eq.s32.totalorder %s22, 0
      %p117 = por %p115, %p116
      %p118 = scmp.le.s32.totalorder 1, %s16
      %p119 = scmp.lt.s32.totalorder %s16, 3
      %p120 = pnand %p118, %p119
      %p121 = pneg %p120
      // Predicated region
      $region9: #{tpu_custom_call.1} parent=5 // pred_check
        _
      $region10: #{tpu_custom_call.1} parent=5 // pred_check_branch
        %123 = sbr.rel (%p120) target = $region12
      $region11: #{tpu_custom_call.1} parent=5 // pred_region
        %s124 = ssub.s32 %s16, 1
        // Predicated region
        $region13: #{tpu_custom_call.1} parent=11 // pred_check
          %p125 = pneg %p63
        $region14: #{tpu_custom_call.1} parent=11 // pred_check_branch
          %127 = sbr.rel (%p125) target = $region16
        $region15: #{tpu_custom_call.1} parent=11 // pred_region
          %s129 = ssub.s32 4096, 4096
          %130 = vsyncadd [#allocation6], %s129
          %s131 = sshll.u32 [#allocation5], 4
          %s132 = int_to_ptr.vmem [resolvable:$true] %s131
          %137 = dma.hbm_to_vmem [thread:$0]  %s1, 4096, %s132, [#allocation6], 256, 256, 16
        $region16: #{tpu_custom_call.1} parent=11 // pred_fallthru
          _
        // Predicated region
        $region17: #{tpu_custom_call.1} parent=11 // pred_check
          %p138 = pneg %p84
        $region18: #{tpu_custom_call.1} parent=11 // pred_check_branch
          %140 = sbr.rel (%p138) target = $region20
        $region19: #{tpu_custom_call.1} parent=11 // pred_region
          _
        $region20: #{tpu_custom_call.1} parent=11 // pred_fallthru
          _
      $region12: #{tpu_custom_call.1} parent=5 // pred_fallthru
        _
      %p141 = scmp.lt.s32.totalorder %s16, 2
      // Predicated region
      $region21: #{tpu_custom_call.1} parent=5 // pred_check
        %p142 = pneg %p141
      $region22: #{tpu_custom_call.1} parent=5 // pred_check_branch
        %144 = sbr.rel (%p142) target = $region24
      $region23: #{tpu_custom_call.1} parent=5 // pred_region
        // Predicated region
        $region25: #{tpu_custom_call.1} parent=23 // pred_check
          %p145 = pneg %p36
        $region26: #{tpu_custom_call.1} parent=23 // pred_check_branch
          %147 = sbr.rel (%p145) target = $region28
        $region27: #{tpu_custom_call.1} parent=23 // pred_region
          %s148 = sand.u32 %s26, 1
          %s149 = scalar_lea.sflag [#allocation3], %s148
          %s150 = sand.u32 %s26, 1
          %s151 = smul.addr %s150, 32
          %s152 = scalar_lea.vmem [#allocation2], %s151
          %s153 = smul.u32 4, %s16
          %s155 = ssub.s32 512, 512
          %156 = vsyncadd %s149, %s155
          %s157 = smul.addr %s153, 128
          %s158 = scalar_lea.hbm %s0, %s157
          %s159 = sshll.u32 %s152, 4
          %s160 = int_to_ptr.vmem [resolvable:$true] %s159
          %165 = dma.hbm_to_vmem [thread:$0]  %s158, 512, %s160, %s149, 128, 128, 8
        $region28: #{tpu_custom_call.1} parent=23 // pred_fallthru
          _
      $region24: #{tpu_custom_call.1} parent=5 // pred_fallthru
        _
      %p166 = scmp.le.s32.totalorder 1, %s16
      %p167 = scmp.lt.s32.totalorder %s16, 3
      %p168 = pnand %p166, %p167
      %p169 = pneg %p168
      // Predicated region
      $region29: #{tpu_custom_call.1} parent=5 // pred_check
        _
      $region30: #{tpu_custom_call.1} parent=5 // pred_check_branch
        %171 = sbr.rel (%p168) target = $region32
      $region31: #{tpu_custom_call.1} parent=5 // pred_region
        %s172 = ssub.s32 %s16, 1
        %s173 = sand.u32 %s29, 1
        %s174 = scalar_lea.sflag [#allocation3], %s173
        %s175 = sand.u32 %s29, 1
        %s176 = smul.addr %s175, 32
        %s177 = scalar_lea.vmem [#allocation2], %s176
        // Predicated region
        $region33: #{tpu_custom_call.1} parent=31 // pred_check
          %p178 = pneg %p42
        $region34: #{tpu_custom_call.1} parent=31 // pred_check_branch
          %180 = sbr.rel (%p178) target = $region36
        $region35: #{tpu_custom_call.1} parent=31 // pred_region
          %181 = dma.done %s174, 512
        $region36: #{tpu_custom_call.1} parent=31 // pred_fallthru
          _
        // Predicated region
        $region37: #{tpu_custom_call.1} parent=31 // pred_check
          %p182 = pneg %p63
        $region38: #{tpu_custom_call.1} parent=31 // pred_check_branch
          %184 = sbr.rel (%p182) target = $region40
        $region39: #{tpu_custom_call.1} parent=31 // pred_region
          %185 = dma.done [#allocation6], 4096
        $region40: #{tpu_custom_call.1} parent=31 // pred_fallthru
          _
        %s186 = sand.u32 %s29, 1
        %s187 = scalar_lea.sflag [#allocation3], %s186
        %s188 = sand.u32 %s29, 1
        %s189 = smul.addr %s188, 32
        %s190 = scalar_lea.vmem [#allocation2], %s189
        %p191 = pneg %p42
        %p192 = pneg %p39
        %p193 = pneg %p63
        %p194 = pneg %p60
        %p195 = pneg %p84
        %p196 = pneg %p81
        %p197 = pneg %p110
        %p198 = pneg %p107
        %s199 = sand.u32 %s97, 1
        %s200 = scalar_lea.sflag [#allocation4], %s199
        %s201 = sand.u32 %s97, 1
        %s202 = smul.addr %s201, 128
        %s203 = scalar_lea.vmem [#allocation7], %s202
        %s204 = smul.u32 4, %s21
        %s205 = smul.u32 4, %s21
        %v207 = vld [vmem:[%s177] sm:$0xff]
        %v208 = vld [vmem:[%s177 + $0x8] sm:$0xff]
        %v209 = vld [vmem:[%s177 + $0x10] sm:$0xff]
        %v210 = vld [vmem:[%s177 + $0x18] sm:$0xff]
        %v211 = vpack.c.bf16 %v208, %v207
        %v212 = vpack.c.bf16 %v210, %v209
        %v213 = vld [vmem:[#allocation5] sm:$0xff]
        %v214 = vld [vmem:[#allocation5 + $0x8] sm:$0xff]
        %v215 = vld [vmem:[#allocation5 + $0x10] sm:$0xff]
        %v216 = vld [vmem:[#allocation5 + $0x18] sm:$0xff]
        %v217 = vld [vmem:[#allocation5 + $0x20] sm:$0xff]
        %v218 = vld [vmem:[#allocation5 + $0x28] sm:$0xff]
        %v219 = vld [vmem:[#allocation5 + $0x30] sm:$0xff]
        %v220 = vld [vmem:[#allocation5 + $0x38] sm:$0xff]
        %v221 = vld [vmem:[#allocation5 + $0x40] sm:$0xff]
        %v222 = vld [vmem:[#allocation5 + $0x48] sm:$0xff]
        %v223 = vld [vmem:[#allocation5 + $0x50] sm:$0xff]
        %v224 = vld [vmem:[#allocation5 + $0x58] sm:$0xff]
        %v225 = vld [vmem:[#allocation5 + $0x60] sm:$0xff]
        %v226 = vld [vmem:[#allocation5 + $0x68] sm:$0xff]
        %v227 = vld [vmem:[#allocation5 + $0x70] sm:$0xff]
        %v228 = vld [vmem:[#allocation5 + $0x78] sm:$0xff]
        %v229 = vld [vmem:[#allocation5 + $0x80] sm:$0xff]
        %v230 = vld [vmem:[#allocation5 + $0x88] sm:$0xff]
        %v231 = vld [vmem:[#allocation5 + $0x90] sm:$0xff]
        %v232 = vld [vmem:[#allocation5 + $0x98] sm:$0xff]
        %v233 = vld [vmem:[#allocation5 + $0xa0] sm:$0xff]
        %v234 = vld [vmem:[#allocation5 + $0xa8] sm:$0xff]
        %v235 = vld [vmem:[#allocation5 + $0xb0] sm:$0xff]
        %v236 = vld [vmem:[#allocation5 + $0xb8] sm:$0xff]
        %v237 = vld [vmem:[#allocation5 + $0xc0] sm:$0xff]
        %v238 = vld [vmem:[#allocation5 + $0xc8] sm:$0xff]
        %v239 = vld [vmem:[#allocation5 + $0xd0] sm:$0xff]
        %v240 = vld [vmem:[#allocation5 + $0xd8] sm:$0xff]
        %v241 = vld [vmem:[#allocation5 + $0xe0] sm:$0xff]
        %v242 = vld [vmem:[#allocation5 + $0xe8] sm:$0xff]
        %v243 = vld [vmem:[#allocation5 + $0xf0] sm:$0xff]
        %v244 = vld [vmem:[#allocation5 + $0xf8] sm:$0xff]
        %v245 = vld [vmem:[%s2] sm:$0xf]
        %v247 = vlaneseq
        %v248 = vshrl.u32 %v247, 7
        %v249 = vsub.s32 0, %v248
        %v250 = vrot.slane %v245, %v249
        %v251 = vlaneseq
        %v252 = vshrl.u32 %v251, 7
        %v253 = vsub.s32 1, %v252
        %v254 = vrot.slane %v245, %v253
        %v255 = vlaneseq
        %v256 = vshrl.u32 %v255, 7
        %v257 = vsub.s32 2, %v256
        %v258 = vrot.slane %v245, %v257
        %v259 = vlaneseq
        %v260 = vshrl.u32 %v259, 7
        %v261 = vsub.s32 3, %v260
        %v262 = vrot.slane %v245, %v261
        %v299 = vunpack.c.l.b16 %v213
        %v300 = vunpack.c.h.b16 %v213
        %v301 = vunpack.c.l.b16 %v214
        %v302 = vunpack.c.h.b16 %v214
        %v303 = vunpack.c.l.b16 %v215
        %v304 = vunpack.c.h.b16 %v215
        %v305 = vunpack.c.l.b16 %v216
        %v306 = vunpack.c.h.b16 %v216
        %v307 = vunpack.c.l.b16 %v217
        %v308 = vunpack.c.h.b16 %v217
        %v309 = vunpack.c.l.b16 %v218
        %v310 = vunpack.c.h.b16 %v218
        %v311 = vunpack.c.l.b16 %v219
        %v312 = vunpack.c.h.b16 %v219
        %v313 = vunpack.c.l.b16 %v220
        %v314 = vunpack.c.h.b16 %v220
        %v315 = vunpack.c.l.b16 %v221
        %v316 = vunpack.c.h.b16 %v221
        %v317 = vunpack.c.l.b16 %v222
        %v318 = vunpack.c.h.b16 %v222
        %v319 = vunpack.c.l.b16 %v223
        %v320 = vunpack.c.h.b16 %v223
        %v321 = vunpack.c.l.b16 %v224
        %v322 = vunpack.c.h.b16 %v224
        %v323 = vunpack.c.l.b16 %v225
        %v324 = vunpack.c.h.b16 %v225
        %v325 = vunpack.c.l.b16 %v226
        %v326 = vunpack.c.h.b16 %v226
        %v327 = vunpack.c.l.b16 %v227
        %v328 = vunpack.c.h.b16 %v227
        %v329 = vunpack.c.l.b16 %v228
        %v330 = vunpack.c.h.b16 %v228
        %v331 = vunpack.c.l.b16 %v229
        %v332 = vunpack.c.h.b16 %v229
        %v333 = vunpack.c.l.b16 %v230
        %v334 = vunpack.c.h.b16 %v230
        %v335 = vunpack.c.l.b16 %v231
        %v336 = vunpack.c.h.b16 %v231
        %v337 = vunpack.c.l.b16 %v232
        %v338 = vunpack.c.h.b16 %v232
        %v339 = vunpack.c.l.b16 %v233
        %v340 = vunpack.c.h.b16 %v233
        %v341 = vunpack.c.l.b16 %v234
        %v342 = vunpack.c.h.b16 %v234
        %v343 = vunpack.c.l.b16 %v235
        %v344 = vunpack.c.h.b16 %v235
        %v345 = vunpack.c.l.b16 %v236
        %v346 = vunpack.c.h.b16 %v236
        %v347 = vunpack.c.l.b16 %v237
        %v348 = vunpack.c.h.b16 %v237
        %v349 = vunpack.c.l.b16 %v238
        %v350 = vunpack.c.h.b16 %v238
        %v351 = vunpack.c.l.b16 %v239
        %v352 = vunpack.c.h.b16 %v239
        %v353 = vunpack.c.l.b16 %v240
        %v354 = vunpack.c.h.b16 %v240
        %v355 = vunpack.c.l.b16 %v241
        %v356 = vunpack.c.h.b16 %v241
        %v357 = vunpack.c.l.b16 %v242
        %v358 = vunpack.c.h.b16 %v242
        %v359 = vunpack.c.l.b16 %v243
        %v360 = vunpack.c.h.b16 %v243
        %v361 = vunpack.c.l.b16 %v244
        %v362 = vunpack.c.h.b16 %v244
        %v363 = vpack.c.b16 %v303, %v299
        %v364 = vpack.c.b16 %v304, %v300
        %v365 = vpack.c.b16 %v305, %v301
        %v366 = vpack.c.b16 %v306, %v302
        %v367 = vpack.c.b16 %v311, %v307
        %v368 = vpack.c.b16 %v312, %v308
        %v369 = vpack.c.b16 %v313, %v309
        %v370 = vpack.c.b16 %v314, %v310
        %v371 = vpack.c.b16 %v319, %v315
        %v372 = vpack.c.b16 %v320, %v316
        %v373 = vpack.c.b16 %v321, %v317
        %v374 = vpack.c.b16 %v322, %v318
        %v375 = vpack.c.b16 %v327, %v323
        %v376 = vpack.c.b16 %v328, %v324
        %v377 = vpack.c.b16 %v329, %v325
        %v378 = vpack.c.b16 %v330, %v326
        %v379 = vpack.c.b16 %v335, %v331
        %v380 = vpack.c.b16 %v336, %v332
        %v381 = vpack.c.b16 %v337, %v333
        %v382 = vpack.c.b16 %v338, %v334
        %v383 = vpack.c.b16 %v343, %v339
        %v384 = vpack.c.b16 %v344, %v340
        %v385 = vpack.c.b16 %v345, %v341
        %v386 = vpack.c.b16 %v346, %v342
        %v387 = vpack.c.b16 %v351, %v347
        %v388 = vpack.c.b16 %v352, %v348
        %v389 = vpack.c.b16 %v353, %v349
        %v390 = vpack.c.b16 %v354, %v350
        %v391 = vpack.c.b16 %v359, %v355
        %v392 = vpack.c.b16 %v360, %v356
        %v393 = vpack.c.b16 %v361, %v357
        %v394 = vpack.c.b16 %v362, %v358
        %427 = vmatprep.subr.bf16.mxu0 %v364
        %428 = vmatpush1.bf16.msra.mxu0 %v363
        %429 = vmatprep.subr.bf16.mxu0 %v368
        %430 = vmatpush1.bf16.msra.mxu0 %v367
        %431 = vmatprep.subr.bf16.mxu0 %v372
        %432 = vmatpush1.bf16.msra.mxu0 %v371
        %433 = vmatprep.subr.bf16.mxu0 %v376
        %434 = vmatpush1.bf16.msra.mxu0 %v375
        %435 = vmatprep.subr.bf16.mxu0 %v380
        %436 = vmatpush1.bf16.msra.mxu0 %v379
        %437 = vmatprep.subr.bf16.mxu0 %v384
        %438 = vmatpush1.bf16.msra.mxu0 %v383
        %439 = vmatprep.subr.bf16.mxu0 %v388
        %440 = vmatpush1.bf16.msra.mxu0 %v387
        %441 = vmatprep.subr.bf16.mxu0 %v392
        %442 = vmatpush1.bf16.msra.mxu0 %v391
        %443 = vmatprep.subr.bf16.mxu0 0
        %444 = vmatpush1.bf16.msra.mxu0 0
        %445 = vmatprep.subr.bf16.mxu0 0
        %446 = vmatpush1.bf16.msra.mxu0 0
        %447 = vmatprep.subr.bf16.mxu0 0
        %448 = vmatpush1.bf16.msra.mxu0 0
        %449 = vmatprep.subr.bf16.mxu0 0
        %450 = vmatpush1.bf16.msra.mxu0 0
        %451 = vmatprep.subr.bf16.mxu0 0
        %452 = vmatpush1.bf16.msra.mxu0 0
        %453 = vmatprep.subr.bf16.mxu0 0
        %454 = vmatpush1.bf16.msra.mxu0 0
        %455 = vmatprep.subr.bf16.mxu0 0
        %456 = vmatpush1.bf16.msra.mxu0 0
        %457 = vmatprep.subr.bf16.mxu0 0
        %458 = vmatpush1.bf16.msra.mxu0 0
        %459 = vmatprep.mubr.bf16.mxu0 0
        %460 = vmatmul.mubr.bf16.gmra.mrb[0].mxu0 %v211
        %v461 = vpop.f32.mrb[0].mxu0
        %v462 = vadd.f32 %v250, %v461
        %v463 = vpop.f32.mrb[0].mxu0
        %v464 = vadd.f32 %v254, %v463
        %v465 = vpop.f32.mrb[0].mxu0
        %v466 = vadd.f32 %v250, %v465
        %v467 = vpop.f32.mrb[0].mxu0
        %v468 = vadd.f32 %v254, %v467
        %469 = vmatprep.mubr.bf16.mxu0 0
        %470 = vmatmul.mubr.bf16.gmra.mrb[0].mxu0 %v212
        %v471 = vpop.f32.mrb[0].mxu0
        %v472 = vadd.f32 %v250, %v471
        %v473 = vpop.f32.mrb[0].mxu0
        %v474 = vadd.f32 %v254, %v473
        %v475 = vpop.f32.mrb[0].mxu0
        %v476 = vadd.f32 %v250, %v475
        %v477 = vpop.f32.mrb[0].mxu0
        %v478 = vadd.f32 %v254, %v477
        %479 = vdwg.mxu0
        %480 = vmatprep.subr.bf16.mxu0 %v366
        %481 = vmatpush1.bf16.msra.mxu0 %v365
        %482 = vmatprep.subr.bf16.mxu0 %v370
        %483 = vmatpush1.bf16.msra.mxu0 %v369
        %484 = vmatprep.subr.bf16.mxu0 %v374
        %485 = vmatpush1.bf16.msra.mxu0 %v373
        %486 = vmatprep.subr.bf16.mxu0 %v378
        %487 = vmatpush1.bf16.msra.mxu0 %v377
        %488 = vmatprep.subr.bf16.mxu0 %v382
        %489 = vmatpush1.bf16.msra.mxu0 %v381
        %490 = vmatprep.subr.bf16.mxu0 %v386
        %491 = vmatpush1.bf16.msra.mxu0 %v385
        %492 = vmatprep.subr.bf16.mxu0 %v390
        %493 = vmatpush1.bf16.msra.mxu0 %v389
        %494 = vmatprep.subr.bf16.mxu0 %v394
        %495 = vmatpush1.bf16.msra.mxu0 %v393
        %496 = vmatprep.subr.bf16.mxu0 0
        %497 = vmatpush1.bf16.msra.mxu0 0
        %498 = vmatprep.subr.bf16.mxu0 0
        %499 = vmatpush1.bf16.msra.mxu0 0
        %500 = vmatprep.subr.bf16.mxu0 0
        %501 = vmatpush1.bf16.msra.mxu0 0
        %502 = vmatprep.subr.bf16.mxu0 0
        %503 = vmatpush1.bf16.msra.mxu0 0
        %504 = vmatprep.subr.bf16.mxu0 0
        %505 = vmatpush1.bf16.msra.mxu0 0
        %506 = vmatprep.subr.bf16.mxu0 0
        %507 = vmatpush1.bf16.msra.mxu0 0
        %508 = vmatprep.subr.bf16.mxu0 0
        %509 = vmatpush1.bf16.msra.mxu0 0
        %510 = vmatprep.subr.bf16.mxu0 0
        %511 = vmatpush1.bf16.msra.mxu0 0
        %512 = vmatprep.mubr.bf16.mxu0 0
        %513 = vmatmul.mubr.bf16.gmra.mrb[0].mxu0 %v211
        %v514 = vpop.f32.mrb[0].mxu0
        %v515 = vadd.f32 %v258, %v514
        %v516 = vpop.f32.mrb[0].mxu0
        %v517 = vadd.f32 %v262, %v516
        %v518 = vpop.f32.mrb[0].mxu0
        %v519 = vadd.f32 %v258, %v518
        %v520 = vpop.f32.mrb[0].mxu0
        %v521 = vadd.f32 %v262, %v520
        %522 = vmatprep.mubr.bf16.mxu0 0
        %523 = vmatmul.mubr.bf16.gmra.mrb[0].mxu0 %v212
        %v524 = vpop.f32.mrb[0].mxu0
        %v525 = vadd.f32 %v258, %v524
        %v526 = vpop.f32.mrb[0].mxu0
        %v527 = vadd.f32 %v262, %v526
        %v528 = vpop.f32.mrb[0].mxu0
        %v529 = vadd.f32 %v258, %v528
        %v530 = vpop.f32.mrb[0].mxu0
        %v531 = vadd.f32 %v262, %v530
        %532 = vdwg.mxu0
        %533 = vst [vmem:[%s203] sm:$0xff] %v462
        %534 = vst [vmem:[%s203 + $0x8] sm:$0xff] %v464
        %535 = vst [vmem:[%s203 + $0x10] sm:$0xff] %v515
        %536 = vst [vmem:[%s203 + $0x18] sm:$0xff] %v517
        %537 = vst [vmem:[%s203 + $0x20] sm:$0xff] %v466
        %538 = vst [vmem:[%s203 + $0x28] sm:$0xff] %v468
        %539 = vst [vmem:[%s203 + $0x30] sm:$0xff] %v519
        %540 = vst [vmem:[%s203 + $0x38] sm:$0xff] %v521
        %541 = vst [vmem:[%s203 + $0x40] sm:$0xff] %v472
        %542 = vst [vmem:[%s203 + $0x48] sm:$0xff] %v474
        %543 = vst [vmem:[%s203 + $0x50] sm:$0xff] %v525
        %544 = vst [vmem:[%s203 + $0x58] sm:$0xff] %v527
        %545 = vst [vmem:[%s203 + $0x60] sm:$0xff] %v476
        %546 = vst [vmem:[%s203 + $0x68] sm:$0xff] %v478
        %547 = vst [vmem:[%s203 + $0x70] sm:$0xff] %v529
        %548 = vst [vmem:[%s203 + $0x78] sm:$0xff] %v531
        %s549 = sand.u32 %s97, 1
        %s550 = scalar_lea.sflag [#allocation4], %s549
        %s551 = sand.u32 %s97, 1
        %s552 = smul.addr %s551, 128
        %s553 = scalar_lea.vmem [#allocation7], %s552
        // Predicated region
        $region41: #{tpu_custom_call.1} parent=31 // pred_check
          %p554 = pneg %p107
        $region42: #{tpu_custom_call.1} parent=31 // pred_check_branch
          %556 = sbr.rel (%p554) target = $region44
        $region43: #{tpu_custom_call.1} parent=31 // pred_region
          %s557 = smul.u32 4, %s21
          %s559 = ssub.s32 2048, 2048
          %560 = vsyncadd %s550, %s559
          %s561 = smul.addr %s557, 4
          %s562 = smul.addr %s561, 128
          %s563 = scalar_lea.hbm %s3, %s562
          %s564 = sshll.u32 %s553, 4
          %s565 = int_to_ptr.vmem [resolvable:$true] %s564
          %570 = dma.vmem_to_hbm [thread:$0]  %s565, 2048, %s563, %s550, 512, 512, 32
        $region44: #{tpu_custom_call.1} parent=31 // pred_fallthru
          _
      $region32: #{tpu_custom_call.1} parent=5 // pred_fallthru
        _
      %p571 = scmp.le.s32.totalorder 2, %s16
      // Predicated region
      $region45: #{tpu_custom_call.1} parent=5 // pred_check
        %p572 = pneg %p571
      $region46: #{tpu_custom_call.1} parent=5 // pred_check_branch
        %574 = sbr.rel (%p572) target = $region48
      $region47: #{tpu_custom_call.1} parent=5 // pred_region
        %s575 = ssub.s32 %s16, 2
        // Predicated region
        $region49: #{tpu_custom_call.1} parent=47 // pred_check
          %p576 = pneg %p113
        $region50: #{tpu_custom_call.1} parent=47 // pred_check_branch
          %578 = sbr.rel (%p576) target = $region52
        $region51: #{tpu_custom_call.1} parent=47 // pred_region
          %s579 = sand.u32 %s98, 1
          %s580 = scalar_lea.sflag [#allocation4], %s579
          %s581 = sand.u32 %s98, 1
          %s582 = smul.addr %s581, 128
          %s583 = scalar_lea.vmem [#allocation7], %s582
          %584 = dma.done %s580, 2048
        $region52: #{tpu_custom_call.1} parent=47 // pred_fallthru
          _
      $region48: #{tpu_custom_call.1} parent=5 // pred_fallthru
        _
    $region6: #{tpu_custom_call.1} parent=1 // loop_footer
      %s20 = sadd.s32 1, %s16
    $region7: #{tpu_custom_call.1} parent=1 // loop_footer_branch
      %15 = sbr.rel target = $region3
    $region8: #{tpu_custom_call.1} parent=1 // loop_exit
      _
    %585 = vsyncpa [#allocation3], 1
    %s586 = scalar_lea.sflag [#allocation3], 1
    %587 = vsyncpa %s586, 1
    %588 = vsyncpa [#allocation6], 1
    %589 = vsyncpa [#allocation4], 1
    %s590 = scalar_lea.sflag [#allocation4], 1
    %591 = vsyncpa %s590, 1

</llo_original>
